<compile_context>
chip_gen: v7x
topology: tpu7x:2x2x1
jax: 0.10.0
libtpu: 0.0.40
codegen_flags: <defaults>
</compile_context>

<pallas_src>
import math
import functools

import jax
import jax.numpy as jnp
from jax.experimental import pallas as pl
from jax.experimental.pallas import tpu as pltpu


def _round_up(x: int, m: int) -> int:
    return ((x + m - 1) // m) * m


def _sinusoidal_kernel(t_ref, freqs_ref, phase_ref, out_ref, *, k: int, dim: int):
    # t_ref:     (tile_r, k)      f32 VMEM  (k packed batch rows per output row)
    # freqs_ref: (1, k*dim)       f32 VMEM  tiled [freqs, freqs] table
    # phase_ref: (1, k*dim)       f32 VMEM  tiled [0, pi/2] table
    # out_ref:   (tile_r, k*dim)  f32 VMEM
    t = t_ref[...]
    if k == 1:
        t_exp = t  # (tile_r, 1) broadcasts across lanes in the mul below
    else:
        rows = t.shape[0]
        # Expand (tile_r, k) -> (tile_r, k*dim): static lane slice + broadcast
        # per packed row, single minor-dim concat.  Keeps the store lane-dense.
        t_exp = jnp.concatenate(
            [jnp.broadcast_to(t[:, j:j + 1], (rows, dim)) for j in range(k)],
            axis=-1,
        )
    # One full-width unmasked store; cos(x) == sin(x + pi/2) folded via phase.
    out_ref[...] = jnp.sin(t_exp * freqs_ref[...] + phase_ref[...])


def _pick_row_tile(rows: int, lane_width: int) -> int:
    """Rows per grid step: ~2 MiB of output per step, multiple of 8, >=2 steps."""
    if rows < 16:
        return rows  # block_shape == full array dim satisfies the (8,128) rule
    target_bytes = 2 << 20
    tile = max(8, (target_bytes // (lane_width * 4)) // 8 * 8)
    # Guarantee at least 2 grid steps so the "parallel" axis can shard across
    # both v7x TensorCores (neutral on v5e/v6e which have a single TC).
    half = max(8, ((rows + 1) // 2) // 8 * 8)
    return min(tile, half)


def sinusoidal_position_embeddings(time: jax.Array, dim: int) -> jax.Array:
    """time: (B,) float array -> (B, dim) float32 embeddings."""
    assert dim % 2 == 0, "dim must be even"
    half_dim = dim // 2
    assert half_dim > 1, "dim must be >= 4 (half_dim - 1 division in reference)"

    B = time.shape[0]

    # Lane packing factor: pack k batch rows per 128-lane output row when the
    # embedding is narrower than a vreg row.
    k = 128 // dim if (dim < 128 and 128 % dim == 0) else 1
    W = k * dim
    B_pad = _round_up(B, k)
    rows = B_pad // k

    t = time.astype(jnp.float32)
    if B_pad != B:
        t = jnp.pad(t, (0, B_pad - B))
    t2 = t.reshape(rows, k)

    # Hoisted frequency / phase tables (compile-time constant folded by XLA).
    scale = math.log(10000.0) / (half_dim - 1)
    freqs = jnp.exp(jnp.arange(half_dim, dtype=jnp.float32) * (-scale))
    freqs_full = jnp.concatenate([freqs, freqs])                        # (dim,)
    phase = jnp.concatenate(
        [jnp.zeros((half_dim,), jnp.float32),
         jnp.full((half_dim,), math.pi / 2, dtype=jnp.float32)])        # (dim,)
    freqs_row = jnp.tile(freqs_full, (k,)).reshape(1, W)
    phase_row = jnp.tile(phase, (k,)).reshape(1, W)

    tile_r = _pick_row_tile(rows, W)
    grid = (pl.cdiv(rows, tile_r),)

    # Explicit VMEM budget (double-buffered blocks + headroom).
    # Note: the (tile_r, k) time block is lane-padded to 128 in VMEM; the
    # (1, W) tables are sublane-padded to 8.
    sub_r = _round_up(tile_r, 8)
    lane_w = _round_up(W, 128)
    t_block_bytes = sub_r * 128 * 4
    tab_block_bytes = 8 * lane_w * 4
    out_block_bytes = sub_r * lane_w * 4
    vmem_bytes = 2 * (t_block_bytes + 2 * tab_block_bytes + out_block_bytes) + (1 << 20)
    vmem_bytes = int(min(max(vmem_bytes, 4 << 20), 32 << 20))

    cost = pl.CostEstimate(
        flops=2 * rows * W,                # mul + phase add per output element
        transcendentals=rows * W,          # one sin per output element
        bytes_accessed=rows * k * 4 + 2 * W * 4 + rows * W * 4,
    )

    kernel = functools.partial(_sinusoidal_kernel, k=k, dim=dim)
    out_packed = pl.pallas_call(
        kernel,
        out_shape=jax.ShapeDtypeStruct((rows, W), jnp.float32),
        grid=grid,
        in_specs=[
            pl.BlockSpec((tile_r, k), lambda i: (i, 0)),     # packed time rows
            pl.BlockSpec((1, W), lambda i: (0, 0)),          # shared freqs table
            pl.BlockSpec((1, W), lambda i: (0, 0)),          # shared phase table
        ],
        out_specs=pl.BlockSpec((tile_r, W), lambda i: (i, 0)),
        compiler_params=pltpu.CompilerParams(
            dimension_semantics=("parallel",),
            vmem_limit_bytes=vmem_bytes,
        ),
        cost_estimate=cost,
    )(t2, freqs_row, phase_row)

    # Unpack the lane-dense slab back to (B, dim): pure layout plumbing.
    out = out_packed.reshape(B_pad, dim)
    if B_pad != B:
        out = out[:B]
    return out


def _reference(time: jax.Array, dim: int) -> jax.Array:
    half_dim = dim // 2
    scale = math.log(10000.0) / (half_dim - 1)
    freqs = jnp.exp(jnp.arange(half_dim, dtype=jnp.float32) * -scale)
    args = time.astype(jnp.float32)[:, None] * freqs[None, :]
    return jnp.concatenate([jnp.sin(args), jnp.cos(args)], axis=-1)


if __name__ == "__main__":
    # Tolerance note: the single-store formulation computes cos(x) as
    # sin(x + pi/2); for diffusion timesteps up to ~1000 the extra f32 add
    # rounds by up to ~half an ulp of 1000 (~3e-5), so compare at atol=2e-4.
    ATOL, RTOL = 2e-4, 1e-5

    key = jax.random.PRNGKey(0)
    batch = 8
    dim = 32  # half_dim = 16 -> packed path, k = 4 rows per 128-lane slab

    time = jax.random.uniform(
        key, (batch,), dtype=jnp.float32, minval=0.0, maxval=1000.0
    )
    out = jax.block_until_ready(sinusoidal_position_embeddings(time, dim))
    assert out.shape == (batch, dim) and out.dtype == jnp.float32
    assert jnp.allclose(out, _reference(time, dim), atol=ATOL, rtol=RTOL)

    # Larger batch: multi-step grid on the packed lane-dense path.
    big_time = jax.random.uniform(
        jax.random.PRNGKey(1), (4096,), dtype=jnp.float32, minval=0.0, maxval=1000.0
    )
    big_out = jax.block_until_ready(sinusoidal_position_embeddings(big_time, 32))
    assert jnp.allclose(big_out, _reference(big_time, 32), atol=ATOL, rtol=RTOL)

    # dim >= 128: unpacked (k = 1) path, ragged batch exercises partial blocks.
    wide_time = jax.random.uniform(
        jax.random.PRNGKey(2), (37,), dtype=jnp.float32, minval=0.0, maxval=1000.0
    )
    wide_out = jax.block_until_ready(sinusoidal_position_embeddings(wide_time, 256))
    assert jnp.allclose(wide_out, _reference(wide_time, 256), atol=ATOL, rtol=RTOL)

    print("KERNEL_OK")
</pallas_src>

<mosaic_0001>
module attributes {stable_mosaic.version = 11 : i64} {
  func.func @_sinusoidal_kernel(%arg0: i32, %arg1: memref<2x4xf32, #tpu.memory_space<vmem>>, %arg2: memref<1x128xf32, #tpu.memory_space<vmem>>, %arg3: memref<1x128xf32, #tpu.memory_space<vmem>>, %arg4: memref<2x128xf32, #tpu.memory_space<vmem>>) attributes {dimension_semantics = [#tpu.dimension_semantics<parallel>], iteration_bounds = array<i64: 1>, scalar_prefetch = 0 : i64, scratch_operands = 0 : i64, tpu.core_type = #tpu.core_type<tc>, window_params = [{transform_indices = @transform_0, window_bounds = array<i64: 2, 4>}, {pipeline_mode = #tpu.pipeline_mode<synchronous>, transform_indices = @transform_1, window_bounds = array<i64: 1, 128>}, {pipeline_mode = #tpu.pipeline_mode<synchronous>, transform_indices = @transform_2, window_bounds = array<i64: 1, 128>}, {transform_indices = @transform_3, window_bounds = array<i64: 2, 128>}]} {
    %c0 = arith.constant 0 : index
    %c0_0 = arith.constant 0 : index
    %0 = vector.load %arg1[%c0, %c0_0] : memref<2x4xf32, #tpu.memory_space<vmem>>, vector<2x4xf32>
    %1 = vector.extract_strided_slice %0 {offsets = [0, 0], sizes = [2, 1], strides = [1, 1]} : vector<2x4xf32> to vector<2x1xf32>
    %2 = vector.shape_cast %1 : vector<2x1xf32> to vector<2x1xf32>
    %3 = vector.broadcast %2 : vector<2x1xf32> to vector<2x32xf32>
    %4 = vector.extract_strided_slice %0 {offsets = [0, 1], sizes = [2, 1], strides = [1, 1]} : vector<2x4xf32> to vector<2x1xf32>
    %5 = vector.shape_cast %4 : vector<2x1xf32> to vector<2x1xf32>
    %6 = vector.broadcast %5 : vector<2x1xf32> to vector<2x32xf32>
    %7 = vector.extract_strided_slice %0 {offsets = [0, 2], sizes = [2, 1], strides = [1, 1]} : vector<2x4xf32> to vector<2x1xf32>
    %8 = vector.shape_cast %7 : vector<2x1xf32> to vector<2x1xf32>
    %9 = vector.broadcast %8 : vector<2x1xf32> to vector<2x32xf32>
    %10 = vector.extract_strided_slice %0 {offsets = [0, 3], sizes = [2, 1], strides = [1, 1]} : vector<2x4xf32> to vector<2x1xf32>
    %11 = vector.shape_cast %10 : vector<2x1xf32> to vector<2x1xf32>
    %12 = vector.broadcast %11 : vector<2x1xf32> to vector<2x32xf32>
    %13 = tpu.concatenate %3, %6, %9, %12 in 1 : vector<2x32xf32>, vector<2x32xf32>, vector<2x32xf32>, vector<2x32xf32> -> vector<2x128xf32>
    %c0_1 = arith.constant 0 : index
    %c0_2 = arith.constant 0 : index
    %14 = vector.load %arg2[%c0_1, %c0_2] : memref<1x128xf32, #tpu.memory_space<vmem>>, vector<1x128xf32>
    %15 = vector.broadcast %14 : vector<1x128xf32> to vector<2x128xf32>
    %16 = arith.mulf %13, %15 : vector<2x128xf32>
    %c0_3 = arith.constant 0 : index
    %c0_4 = arith.constant 0 : index
    %17 = vector.load %arg3[%c0_3, %c0_4] : memref<1x128xf32, #tpu.memory_space<vmem>>, vector<1x128xf32>
    %18 = vector.broadcast %17 : vector<1x128xf32> to vector<2x128xf32>
    %19 = arith.addf %16, %18 : vector<2x128xf32>
    %20 = math.sin %19 : vector<2x128xf32>
    %c0_5 = arith.constant 0 : index
    %c0_6 = arith.constant 0 : index
    %21 = vector.load %arg4[%c0_5, %c0_6] : memref<2x128xf32, #tpu.memory_space<vmem>>, vector<2x128xf32>
    tpu.vector_store %arg4[%c0_5, %c0_6], %20 {strides = array<i32>} : memref<2x128xf32, #tpu.memory_space<vmem>>, vector<2x128xf32>,
    return
  }
  func.func @transform_0(%arg0: i32) -> (i32, i32) {
    %c0_i32 = arith.constant 0 : i32
    %c0_i32_0 = arith.constant 0 : i32
    return %arg0, %c0_i32 : i32, i32
  }
  func.func @transform_1(%arg0: i32) -> (i32, i32) {
    %c0_i32 = arith.constant 0 : i32
    %c0_i32_0 = arith.constant 0 : i32
    %c0_i32_1 = arith.constant 0 : i32
    return %c0_i32, %c0_i32_0 : i32, i32
  }
  func.func @transform_2(%arg0: i32) -> (i32, i32) {
    %c0_i32 = arith.constant 0 : i32
    %c0_i32_0 = arith.constant 0 : i32
    %c0_i32_1 = arith.constant 0 : i32
    return %c0_i32, %c0_i32_0 : i32, i32
  }
  func.func @transform_3(%arg0: i32) -> (i32, i32) {
    %c0_i32 = arith.constant 0 : i32
    %c0_i32_0 = arith.constant 0 : i32
    return %arg0, %c0_i32 : i32, i32
  }
}

</mosaic_0001>

<llo_original>
// kernel: tpu_custom_call.1
$region0: #{tpu_custom_call.1}
  #allocation0 [shape = 'u32[]', space=smem, size = 0x4, offset = 0x4, fixed_abs, tag = 'smem constant byte address 0x4 - core index']
  #allocation1 [shape = 'u32[144,128]{1,0:T(1,128)}', space=vmem, size = 0x12000, scoped, tag = 'internal scratch']
  %s0 = inlined_call_operand.hbm [shape: f32[2,4], index: 0, kind: input, shape index: {}]
  %s1 = inlined_call_operand.vmem [shape: f32[1,128], index: 1, kind: input, shape index: {}]
  %s2 = inlined_call_operand.vmem [shape: f32[1,128], index: 2, kind: input, shape index: {}]
  %s3 = inlined_call_operand.hbm [shape: f32[2,128], index: 3, kind: output, shape index: {}]
  %s4 = sld [smem:[#allocation0]]
  $region26: #{tpu_custom_call.1} parent=0
    _
  %s6 = ssub.s32 1, %s4
  %s7 = scalar_select 0, %s6, %s4
  $region1: #{tpu_custom_call.1} parent=0
    #allocation2 [shape = 'u8[1024]{0}', space=vmem, size = 0x400, scoped, tag = 'input window, operand 0, single buffered']
    #allocation3 [shape = 's32[1]{0}', space=sflag, size = 0x4, scoped, tag = 'scoped memory for tpu_custom_call.1']
    #allocation4 [shape = 's32[1]{0}', space=sflag, size = 0x4, scoped, tag = 'scoped memory for tpu_custom_call.1']
    #allocation5 [shape = 'u8[1024]{0}', space=vmem, size = 0x400, scoped, tag = 'output window, operand 0, single buffered']
    %8 = vsyncpa [#allocation3], 0
    %9 = vsyncpa [#allocation4], 0
    // Predicated region
    $region2: #{tpu_custom_call.1} parent=1 // pred_check
      _
    $region3: #{tpu_custom_call.1} parent=1 // pred_check_branch
      %11 = sbr.rel (0) target = $region5
    $region4: #{tpu_custom_call.1} parent=1 // pred_region
      %s13 = ssub.s32 32, 32
      %14 = vsyncadd [#allocation3], %s13
      %s16 = sshll.u32 [#allocation2], 4
      %s17 = int_to_ptr.vmem [resolvable:$true] %s16
      %19 = dma.hbm_to_vmem [thread:$0]  %s0, 32, %s17, [#allocation3]
    $region5: #{tpu_custom_call.1} parent=1 // pred_fallthru
      _
    // Predicated region
    $region6: #{tpu_custom_call.1} parent=1 // pred_check
      _
    $region7: #{tpu_custom_call.1} parent=1 // pred_check_branch
      %21 = sbr.rel (0) target = $region9
    $region8: #{tpu_custom_call.1} parent=1 // pred_region
      _
    $region9: #{tpu_custom_call.1} parent=1 // pred_fallthru
      _
    // Predicated region
    $region10: #{tpu_custom_call.1} parent=1 // pred_check
      _
    $region11: #{tpu_custom_call.1} parent=1 // pred_check_branch
      %23 = sbr.rel (0) target = $region13
    $region12: #{tpu_custom_call.1} parent=1 // pred_region
      _
    $region13: #{tpu_custom_call.1} parent=1 // pred_fallthru
      _
    // Predicated region
    $region14: #{tpu_custom_call.1} parent=1 // pred_check
      _
    $region15: #{tpu_custom_call.1} parent=1 // pred_check_branch
      %25 = sbr.rel (0) target = $region17
    $region16: #{tpu_custom_call.1} parent=1 // pred_region
      %26 = dma.done [#allocation3], 32
    $region17: #{tpu_custom_call.1} parent=1 // pred_fallthru
      _
    %v27 = vld [vmem:[#allocation2] sm:$0x3]
    %29 = vset.pattern.permute.xlu0 0
    %30 = vperm.xlu0 %29, %v27
    %v31 = vpop.permute.xlu0 %30
    %33 = vset.pattern.permute.xlu0 1
    %34 = vperm.xlu0 %33, %v27
    %v35 = vpop.permute.xlu0 %34
    %37 = vset.pattern.permute.xlu0 2
    %38 = vperm.xlu0 %37, %v27
    %v39 = vpop.permute.xlu0 %38
    %41 = vset.pattern.permute.xlu0 3
    %42 = vperm.xlu0 %41, %v27
    %v43 = vpop.permute.xlu0 %42
    %vm45 = vcmask 261120
    %v46 = vsel %vm45, %v31, %v35
    %vm47 = vcmask 523264
    %v48 = vsel %vm47, %v46, %v39
    %vm49 = vcmask 785408
    %v50 = vsel %vm49, %v48, %v43
    %v51 = vld [vmem:[%s1] sm:$0x1]
    %v53 = vlaneseq
    %v54 = vshrl.u32 %v53, 7
    %v55 = vsub.s32 0, %v54
    %v56 = vrot.slane %v51, %v55
    %v58 = vmul.f32 %v50, %v56
    %v59 = vld [vmem:[%s2] sm:$0x1]
    %v61 = vlaneseq
    %v62 = vshrl.u32 %v61, 7
    %v63 = vsub.s32 0, %v62
    %v64 = vrot.slane %v59, %v63
    %v66 = vadd.f32 %v58, %v64
    %v67 = vand.u32 2147483647, %v66
    %vm68 = vcmp.le.f32.partialorder %v67, 0.7853982
    %vm69 = vcmp.lt.s32.totalorder %v66, 0
    %v70 = vand.u32 %v66, 2139095040
    %v71 = vshrl.u32 %v70, 23
    %v72 = vsub.s32 %v71, 127
    %v73 = vand.u32 2147483647, %v66
    %v74 = vand.u32 %v73, 8388607
    %v75 = vor.u32 %v74, 8388608
    %v76 = vsub.s32 0, %v75
    %v77 = vadd.s32 %v72, 1
    %vm78 = vcmp.gt.s32.totalorder %v77, 0
    %v79 = vsel %vm78, %v77, 0
    %v80 = vshrl.u32 %v79, 5
    %v81 = vand.u32 %v79, 31
    %v82 = vsub.s32 32, %v81
    %v83 = vshrl.u32 683565275, %v82
    %v84 = vshll.u32 683565275, %v81
    %v85 = vshrl.u32 2475754826, %v82
    %v86 = vor.u32 %v84, %v85
    %v87 = vshll.u32 2475754826, %v81
    %v88 = vshrl.u32 2131351028, %v82
    %v89 = vor.u32 %v87, %v88
    %v90 = vshll.u32 2131351028, %v81
    %v91 = vshrl.u32 2102212464, %v82
    %v92 = vor.u32 %v90, %v91
    %v93 = vshll.u32 2102212464, %v81
    %v94 = vshrl.u32 920167782, %v82
    %v95 = vor.u32 %v93, %v94
    %v96 = vshll.u32 920167782, %v81
    %v97 = vshrl.u32 1326507024, %v82
    %v98 = vor.u32 %v96, %v97
    %vm99 = vcmp.lt.s32.totalorder %v80, 1
    %vm100 = vcmp.lt.s32.totalorder %v80, 2
    %vm101 = vcmp.lt.s32.totalorder %v80, 3
    %vm102 = vcmp.lt.s32.totalorder %v80, 4
    %v103 = vsel %vm99, %v83, %v86
    %v104 = vsel %vm102, %v92, 2102212464
    %v105 = vsel %vm101, %v89, %v104
    %v106 = vsel %vm100, %v103, %v105
    %v107 = vsel %vm99, %v86, %v89
    %v108 = vsel %vm102, %v95, 920167782
    %v109 = vsel %vm101, %v92, %v108
    %v110 = vsel %vm100, %v107, %v109
    %v111 = vsel %vm99, %v89, %v92
    %v112 = vsel %vm102, %v98, 1326507024
    %v113 = vsel %vm101, %v95, %v112
    %v114 = vsel %vm100, %v111, %v113
    %v115 = vshll.u32 %v75, 8
    %v116 = vmul.u32.u64.compose %v115, %v114
    %v117 = vextract.low.u32 %v116
    %v118 = vextract.high.u32 %v116
    %v119 = vmul.u32.u64.compose %v115, %v110
    %v120 = vextract.low.u32 %v119
    %v121 = vextract.high.u32 %v119
    %v122 = vmul.u32 %v115, %v106
    %v123 = vadd.s32 %v118, %v120
    %vm124 = vc.u32 %v118, %v120
    %v125 = vadd.s32 %v121, 1
    %v126 = vsel %vm124, %v125, %v121
    %v127 = vadd.s32 %v122, %v126
    %v128 = vadd.s32 %v127, 536870912
    %v129 = vshrl.u32 %v128, 30
    %v130 = vshll.u32 %v129, 30
    %v131 = vsub.s32 %v127, %v130
    %vm132 = vcmp.lt.s32.totalorder %v131, 0
    %v133 = vsub.s32 0, %v131
    %v134 = vsel %vm132, %v133, %v131
    %v135 = vclz %v134
    %v136 = vsub.s32 %v135, 2
    %vm137 = vcmp.gt.s32.totalorder 0, %v136
    %v138 = vsel %vm137, 0, %v136
    %v139 = vsub.s32 32, %v138
    %v140 = vshll.u32 %v131, %v138
    %v141 = vshrl.u32 %v123, %v139
    %v142 = vor.u32 %v140, %v141
    %v143 = vsub.s32 4294967266, %v138
    %v144 = vadd.s32 %v143, 127
    %v145 = vshll.u32 %v144, 23
    %v146 = vor.u32 4788187, %v145
    %v147 = vand.u32 2147483647, %v146
    %v149 = vcvt.s32.f32 %v142
    %v150 = vmul.f32 %v149, %v147
    %v151 = vxor.u32 %v150, 2147483648
    %v152 = vsel %vm69, %v151, %v150
    %v153 = vsub.s32 4, %v129
    %v154 = vsel %vm69, %v153, %v129
    %v155 = vsel %vm68, %v66, %v152
    %v156 = vsel %vm68, 0, %v154
    %v157 = vcosq.f32.pop %v155
    %v158 = vsinq.f32.pop %v155
    %vm159 = vweird.f32 %v66
    %v160 = vadd.s32 %v156, 3
    %v161 = vand.u32 %v160, 3
    %vm162 = vcmp.lt.s32.totalorder %v161, 2
    %vm163 = vcmp.eq.s32.totalorder %v161, 0
    %v164 = vxor.u32 %v158, 2147483648
    %v165 = vsel %vm163, %v157, %v164
    %vm166 = vcmp.eq.s32.totalorder %v161, 2
    %v167 = vxor.u32 %v157, 2147483648
    %v168 = vsel %vm166, %v167, %v158
    %v169 = vsel %vm162, %v165, %v168
    %v170 = vsel %vm159, nan, %v169
    %171 = vst [vmem:[#allocation5] sm:$0x3] %v170
    // Predicated region
    $region18: #{tpu_custom_call.1} parent=1 // pred_check
      _
    $region19: #{tpu_custom_call.1} parent=1 // pred_check_branch
      %173 = sbr.rel (0) target = $region21
    $region20: #{tpu_custom_call.1} parent=1 // pred_region
      %s175 = ssub.s32 32, 32
      %176 = vsyncadd [#allocation4], %s175
      %s178 = sshll.u32 [#allocation5], 4
      %s179 = int_to_ptr.vmem [resolvable:$true] %s178
      %181 = dma.vmem_to_hbm [thread:$0]  %s179, 32, %s3, [#allocation4]
    $region21: #{tpu_custom_call.1} parent=1 // pred_fallthru
      _
    // Predicated region
    $region22: #{tpu_custom_call.1} parent=1 // pred_check
      _
    $region23: #{tpu_custom_call.1} parent=1 // pred_check_branch
      %183 = sbr.rel (0) target = $region25
    $region24: #{tpu_custom_call.1} parent=1 // pred_region
      %184 = dma.done [#allocation4], 32
    $region25: #{tpu_custom_call.1} parent=1 // pred_fallthru
      _
    %185 = vsyncpa [#allocation3], 1
    %186 = vsyncpa [#allocation4], 1

</llo_original>
